<compile_context>
chip_gen: v6e
topology: v6e:2x2x1
jax: 0.10.0
libtpu: 0.0.40
codegen_flags: <defaults>
</compile_context>

<pallas_src>
import math

import jax
import jax.numpy as jnp
from jax import lax
from jax.experimental import pallas as pl
from jax.experimental.pallas import tpu as pltpu

_LANES = 128
_PACK = 32      # LCM of sublane packing for f32(8) / bf16(16) / int8(32)
_STRIP = 16     # rows folded per inner-loop step (multiple of bf16 packing)


def _round_up(x, m):
    return ((x + m - 1) // m) * m


def _round_down(x, m):
    return (x // m) * m


def _num_tensorcores():
    """2 TensorCores on v7x-class chips, 1 on v5e/v6e (and on failure)."""
    try:
        kind = jax.devices()[0].device_kind.lower()
    except Exception:
        return 1
    return 2 if ("v7" in kind or "7x" in kind) else 1


def bpr_drug_recommendation_loss(pos_scores, neg_scores, *,
                                 target_tile_bytes=2 << 20):
    """mean(softplus(neg - pos)) == mean(-log(sigmoid(pos - neg))) via Pallas."""
    assert pos_scores.shape == neg_scores.shape
    total = int(pos_scores.size)
    if total == 0:
        return jnp.float32(0.0)            # avoid divide-by-zero edge case
    inv_total = 1.0 / float(total)         # precomputed reciprocal (no divide)

    # ---- free (copy-less) 2-D view of the inputs ---------------------------
    # lane-dense (rows, 128) when the element count allows it, otherwise the
    # natural (prod(leading), last_dim) view.  No padding / concatenation —
    # the ragged grid tail is masked inside the kernel.
    if total % _LANES == 0:
        n_cols = _LANES
    elif pos_scores.ndim >= 2:
        n_cols = int(pos_scores.shape[-1])
    else:
        n_cols = total
    n_rows = total // n_cols
    pos2d = pos_scores.reshape(n_rows, n_cols)
    neg2d = neg_scores.reshape(n_rows, n_cols)

    # ---- tile sizing --------------------------------------------------------
    # TODO(synk): a huge, non-128-aligned last dim (rare) would make a single
    # block exceed the VMEM budget; acceptable for realistic score shapes.
    itemsize = jnp.dtype(pos_scores.dtype).itemsize
    lane_padded_cols = _round_up(n_cols, _LANES)
    max_tile_rows = max(
        _PACK,
        _round_down(target_tile_bytes // (lane_padded_cols * itemsize), _PACK))
    if n_rows <= _PACK:
        tile_rows = n_rows                                  # full-extent block
    else:
        tile_rows = min(max_tile_rows, _round_down(n_rows, _PACK))
    strip = _STRIP if tile_rows % _STRIP == 0 else tile_rows
    n_strips = tile_rows // strip
    unroll = math.gcd(n_strips, 16)

    total_tiles = pl.cdiv(n_rows, tile_rows)
    num_cores = min(_num_tensorcores(), total_tiles)
    tiles_per_core = pl.cdiv(total_tiles, num_cores)

    def in_map(c, t):
        # Clamp: over-provisioned blocks (core-split remainder) re-read the
        # last valid block and are fully masked out inside the kernel.
        return (jnp.minimum(c * tiles_per_core + t, total_tiles - 1), 0)

    def kernel(pos_ref, neg_ref, out_ref, acc_ref):
        c = pl.program_id(0)
        t = pl.program_id(1)

        @pl.when(t == 0)
        def _():
            acc_ref[...] = jnp.zeros_like(acc_ref)

        # Intended (unclamped) global row offset of this block; rows >= n_rows
        # (partial tail block / duplicated clamped block) contribute 0.
        row0 = (c * tiles_per_core + t) * tile_rows
        iota2d = lax.broadcasted_iota(jnp.int32, (strip, n_cols), 0)  # hoisted

        def body(i, carry):
            r0 = pl.multiple_of(i * strip, strip)
            p = pos_ref[pl.ds(r0, strip), :].astype(jnp.float32)
            n = neg_ref[pl.ds(r0, strip), :].astype(jnp.float32)
            diff = p - n
            # numerically stable softplus(-diff) = -log(sigmoid(diff))
            sp = jnp.maximum(-diff, 0.0) + jnp.log1p(jnp.exp(-jnp.abs(diff)))
            valid = (iota2d + (row0 + r0)) < n_rows
            acc_ref[...] += jnp.where(valid, sp, 0.0)
            return carry

        lax.fori_loop(0, n_strips, body, 0, unroll=unroll)

        @pl.when(t == pl.num_programs(1) - 1)
        def _():
            # one sublane (XLU) reduce per core -> lane-dense (1, C) partial
            # row; final cross-lane sum + 1/N scaling happen in the wrapper.
            out_ref[...] = jnp.sum(acc_ref[...], axis=0, keepdims=True)

    partials = pl.pallas_call(
        kernel,
        out_shape=jax.ShapeDtypeStruct((num_cores, n_cols), jnp.float32),
        grid_spec=pltpu.PrefetchScalarGridSpec(
            num_scalar_prefetch=0,
            grid=(num_cores, tiles_per_core),
            in_specs=[
                pl.BlockSpec((tile_rows, n_cols), in_map),
                pl.BlockSpec((tile_rows, n_cols), in_map),
            ],
            out_specs=pl.BlockSpec((1, n_cols), lambda c, t: (c, 0)),
            scratch_shapes=[pltpu.VMEM((strip, n_cols), jnp.float32)],
        ),
        compiler_params=pltpu.CompilerParams(
            # core axis parallel (uses both TCs on v7x), reduction axis arbitrary
            dimension_semantics=("parallel", "arbitrary"),
        ),
    )(pos2d, neg2d)

    # Tiny epilogue in XLA: sum per-core partial rows, scale by 1/N.
    return jnp.sum(partials) * inv_total


def _reference(pos_scores, neg_scores):
    diff = pos_scores.astype(jnp.float32) - neg_scores.astype(jnp.float32)
    return jnp.mean(jnp.maximum(-diff, 0.0) + jnp.log1p(jnp.exp(-jnp.abs(diff))))


if __name__ == "__main__":
    key = jax.random.PRNGKey(0)
    k1, k2, k3, k4, k5, k6 = jax.random.split(key, 6)

    # (1) ragged: 16 users x 37 sampled negatives (NOT a multiple of 128).
    pos = jax.random.normal(k1, (16, 37), dtype=jnp.float32)
    neg = jax.random.normal(k2, (16, 37), dtype=jnp.float32)
    out = jax.block_until_ready(bpr_drug_recommendation_loss(pos, neg))
    ref = _reference(pos, neg)
    assert jnp.allclose(out, ref, atol=1e-5, rtol=1e-5), (out, ref)

    # (2) lane-aligned: 8 x 256 (lane-dense path, single full-extent block).
    pos = jax.random.normal(k3, (8, 256), dtype=jnp.float32)
    neg = jax.random.normal(k4, (8, 256), dtype=jnp.float32)
    out = jax.block_until_ready(bpr_drug_recommendation_loss(pos, neg))
    ref = _reference(pos, neg)
    assert jnp.allclose(out, ref, atol=1e-5, rtol=1e-5), (out, ref)

    # (3) multi-tile grid with a masked partial tail block: 25 x 256 -> 50 lane
    #     rows, tile_rows=32 => 2 grid tiles, 14 masked rows in the last one.
    pos = jax.random.normal(k5, (25, 256), dtype=jnp.float32)
    neg = jax.random.normal(k6, (25, 256), dtype=jnp.float32)
    out = jax.block_until_ready(bpr_drug_recommendation_loss(pos, neg))
    ref = _reference(pos, neg)
    assert jnp.allclose(out, ref, atol=1e-5, rtol=1e-5), (out, ref)

    print("KERNEL_OK")
</pallas_src>

<mosaic_0001>
module attributes {stable_mosaic.version = 11 : i64} {
  func.func @kernel(%arg0: i32, %arg1: i32, %arg2: memref<16x37xf32, #tpu.memory_space<vmem>>, %arg3: memref<16x37xf32, #tpu.memory_space<vmem>>, %arg4: memref<1x37xf32, #tpu.memory_space<vmem>>, %arg5: memref<16x37xf32, #tpu.memory_space<vmem>>) attributes {dimension_semantics = [#tpu.dimension_semantics<parallel>, #tpu.dimension_semantics<arbitrary>], iteration_bounds = array<i64: 1, 1>, scalar_prefetch = 0 : i64, scratch_operands = 1 : i64, tpu.core_type = #tpu.core_type<tc>, window_params = [{transform_indices = @transform_0, window_bounds = array<i64: 16, 37>}, {transform_indices = @transform_1, window_bounds = array<i64: 16, 37>}, {transform_indices = @transform_2, window_bounds = array<i64: 1, 37>}]} {
    %c0_i32 = arith.constant 0 : i32
    %0 = arith.cmpi eq, %arg1, %c0_i32 : i32
    %1 = arith.extui %0 : i1 to i32
    %c0_i32_0 = arith.constant 0 : i32
    %2 = arith.cmpi ne, %1, %c0_i32_0 : i32
    scf.if %2 {
      %cst_15 = arith.constant 0.000000e+00 : f32
      %37 = vector.broadcast %cst_15 : f32 to vector<16x37xf32>
      %c0_16 = arith.constant 0 : index
      %c0_17 = arith.constant 0 : index
      %38 = vector.load %arg5[%c0_16, %c0_17] : memref<16x37xf32, #tpu.memory_space<vmem>>, vector<16x37xf32>
      tpu.vector_store %arg5[%c0_16, %c0_17], %37 {strides = array<i32>} : memref<16x37xf32, #tpu.memory_space<vmem>>, vector<16x37xf32>,
    } else {
    }
    %c1_i32 = arith.constant 1 : i32
    %3 = arith.muli %arg0, %c1_i32 : i32
    %4 = arith.addi %3, %arg1 : i32
    %c16_i32 = arith.constant 16 : i32
    %5 = arith.muli %4, %c16_i32 : i32
    %6 = tpu.iota {dimensions = array<i32: 0>} : vector<16x37xi32>
    %c0_i32_1 = arith.constant 0 : i32
    %c16_i32_2 = arith.constant 16 : i32
    %7 = arith.muli %c0_i32_1, %c16_i32_2 : i32
    %8 = tpu.assume_multiple %7, 16 : i32
    %9 = arith.index_cast %8 : i32 to index
    %c0 = arith.constant 0 : index
    %10 = vector.load %arg2[%9, %c0] : memref<16x37xf32, #tpu.memory_space<vmem>>, vector<16x37xf32>
    %11 = arith.index_cast %8 : i32 to index
    %c0_3 = arith.constant 0 : index
    %12 = vector.load %arg3[%11, %c0_3] : memref<16x37xf32, #tpu.memory_space<vmem>>, vector<16x37xf32>
    %13 = arith.subf %10, %12 : vector<16x37xf32>
    %cst = arith.constant 0.000000e+00 : f32
    %14 = vector.broadcast %cst : f32 to vector<16x37xf32>
    %15 = arith.subf %14, %13 : vector<16x37xf32>
    %cst_4 = arith.constant 0.000000e+00 : f32
    %16 = vector.broadcast %cst_4 : f32 to vector<16x37xf32>
    %17 = arith.maximumf %15, %16 : vector<16x37xf32>
    %18 = math.absf %13 : vector<16x37xf32>
    %cst_5 = arith.constant 0.000000e+00 : f32
    %19 = vector.broadcast %cst_5 : f32 to vector<16x37xf32>
    %20 = arith.subf %19, %18 : vector<16x37xf32>
    %21 = math.exp %20 : vector<16x37xf32>
    %22 = math.log1p %21 : vector<16x37xf32>
    %23 = arith.addf %17, %22 : vector<16x37xf32>
    %24 = arith.addi %5, %8 : i32
    %25 = vector.broadcast %24 : i32 to vector<16x37xi32>
    %26 = arith.addi %6, %25 : vector<16x37xi32>
    %c16_i32_6 = arith.constant 16 : i32
    %27 = vector.broadcast %c16_i32_6 : i32 to vector<16x37xi32>
    %28 = arith.cmpi slt, %26, %27 : vector<16x37xi32>
    %c0_7 = arith.constant 0 : index
    %c0_8 = arith.constant 0 : index
    %29 = vector.load %arg5[%c0_7, %c0_8] : memref<16x37xf32, #tpu.memory_space<vmem>>, vector<16x37xf32>
    %cst_9 = arith.constant 0.000000e+00 : f32
    %30 = vector.broadcast %cst_9 : f32 to vector<16x37xf32>
    %31 = arith.select %28, %23, %30 : vector<16x37xi1>, vector<16x37xf32>
    %32 = arith.addf %29, %31 : vector<16x37xf32>
    %c0_10 = arith.constant 0 : index
    %c0_11 = arith.constant 0 : index
    %33 = vector.load %arg5[%c0_10, %c0_11] : memref<16x37xf32, #tpu.memory_space<vmem>>, vector<16x37xf32>
    tpu.vector_store %arg5[%c0_10, %c0_11], %32 {strides = array<i32>} : memref<16x37xf32, #tpu.memory_space<vmem>>, vector<16x37xf32>,
    %c1_i32_12 = arith.constant 1 : i32
    %c0_i32_13 = arith.constant 0 : i32
    %34 = arith.cmpi eq, %arg1, %c0_i32_13 : i32
    %35 = arith.extui %34 : i1 to i32
    %c0_i32_14 = arith.constant 0 : i32
    %36 = arith.cmpi ne, %35, %c0_i32_14 : i32
    scf.if %36 {
      %c0_15 = arith.constant 0 : index
      %c0_16 = arith.constant 0 : index
      %37 = vector.load %arg5[%c0_15, %c0_16] : memref<16x37xf32, #tpu.memory_space<vmem>>, vector<16x37xf32>
      %cst_17 = arith.constant dense<0.000000e+00> : vector<37xf32>
      %38 = vector.multi_reduction <add>, %37, %cst_17 [0] : vector<16x37xf32> to vector<37xf32>
      %39 = vector.shape_cast %38 : vector<37xf32> to vector<1x37xf32>
      %c0_18 = arith.constant 0 : index
      %c0_19 = arith.constant 0 : index
      %40 = vector.load %arg4[%c0_18, %c0_19] : memref<1x37xf32, #tpu.memory_space<vmem>>, vector<1x37xf32>
      tpu.vector_store %arg4[%c0_18, %c0_19], %39 {strides = array<i32>} : memref<1x37xf32, #tpu.memory_space<vmem>>, vector<1x37xf32>,
    } else {
    }
    return
  }
  func.func @transform_0(%arg0: i32, %arg1: i32) -> (i32, i32) {
    %c1_i32 = arith.constant 1 : i32
    %0 = arith.muli %arg0, %c1_i32 : i32
    %1 = arith.addi %0, %arg1 : i32
    %c0_i32 = arith.constant 0 : i32
    %2 = arith.minsi %1, %c0_i32 : i32
    %c0_i32_0 = arith.constant 0 : i32
    %c0_i32_1 = arith.constant 0 : i32
    return %2, %c0_i32_0 : i32, i32
  }
  func.func @transform_1(%arg0: i32, %arg1: i32) -> (i32, i32) {
    %c1_i32 = arith.constant 1 : i32
    %0 = arith.muli %arg0, %c1_i32 : i32
    %1 = arith.addi %0, %arg1 : i32
    %c0_i32 = arith.constant 0 : i32
    %2 = arith.minsi %1, %c0_i32 : i32
    %c0_i32_0 = arith.constant 0 : i32
    %c0_i32_1 = arith.constant 0 : i32
    return %2, %c0_i32_0 : i32, i32
  }
  func.func @transform_2(%arg0: i32, %arg1: i32) -> (i32, i32) {
    %c0_i32 = arith.constant 0 : i32
    %c0_i32_0 = arith.constant 0 : i32
    return %arg0, %c0_i32 : i32, i32
  }
}

</mosaic_0001>

<llo_original>
// kernel: tpu_custom_call.1
$region0: #{tpu_custom_call.1}
  #allocation0 [shape = 'u32[]', space=smem, size = 0x4, offset = 0x4, fixed_abs, tag = 'smem constant byte address 0x4 - core index']
  #allocation1 [shape = 'u32[144,128]{1,0:T(1,128)}', space=vmem, size = 0x12000, scoped, tag = 'internal scratch']
  #allocation2 [shape = 'f32[16,37]{1,0:T(8,128)}', space=vmem, size = 0x2000, scoped, tag = 'scratch operand']
  %s0 = inlined_call_operand.hbm [shape: f32[16,37], index: 0, kind: input, shape index: {}]
  %s1 = inlined_call_operand.hbm [shape: f32[16,37], index: 1, kind: input, shape index: {}]
  %s2 = inlined_call_operand.hbm [shape: f32[1,37], index: 2, kind: output, shape index: {}]
  %s3 = sld [smem:[#allocation0]]
  $region34: #{tpu_custom_call.1} parent=0
    _
  %s5 = ssub.s32 1, %s3
  %s6 = scalar_select 0, %s5, %s3
  $region1: #{tpu_custom_call.1} parent=0
    #allocation3 [shape = 'u8[8192]{0}', space=vmem, size = 0x2000, scoped, tag = 'input window, operand 0, single buffered']
    #allocation4 [shape = 's32[1]{0}', space=sflag, size = 0x4, scoped, tag = 'scoped memory for tpu_custom_call.1']
    #allocation5 [shape = 's32[1]{0}', space=sflag, size = 0x4, scoped, tag = 'scoped memory for tpu_custom_call.1']
    #allocation6 [shape = 'u8[8192]{0}', space=vmem, size = 0x2000, scoped, tag = 'input window, operand 1, single buffered']
    #allocation7 [shape = 's32[1]{0}', space=sflag, size = 0x4, scoped, tag = 'scoped memory for tpu_custom_call.1']
    #allocation8 [shape = 'u8[512]{0}', space=vmem, size = 0x400, scoped, tag = 'output window, operand 0, single buffered']
    %7 = vsyncpa [#allocation4], 0
    %8 = vsyncpa [#allocation7], 0
    %9 = vsyncpa [#allocation5], 0
    // Predicated region
    $region2: #{tpu_custom_call.1} parent=1 // pred_check
      _
    $region3: #{tpu_custom_call.1} parent=1 // pred_check_branch
      %11 = sbr.rel (0) target = $region5
    $region4: #{tpu_custom_call.1} parent=1 // pred_region
      %s12 = sadd.s32 0, 0
      %p13 = scmp.lt.s32.totalorder %s12, 0
      %s14 = scalar_select %p13, %s12, 0
      %s15 = smul.u32 2, %s14
      %s17 = ssub.s32 256, 256
      %18 = vsyncadd [#allocation4], %s17
      %s19 = smul.addr %s15, 128
      %s20 = scalar_lea.hbm %s0, %s19
      %s21 = sshll.u32 [#allocation3], 4
      %s22 = int_to_ptr.vmem [resolvable:$true] %s21
      %27 = dma.hbm_to_vmem [thread:$0]  %s20, 256, %s22, [#allocation4], 128, 128, 8
    $region5: #{tpu_custom_call.1} parent=1 // pred_fallthru
      _
    // Predicated region
    $region6: #{tpu_custom_call.1} parent=1 // pred_check
      _
    $region7: #{tpu_custom_call.1} parent=1 // pred_check_branch
      %29 = sbr.rel (0) target = $region9
    $region8: #{tpu_custom_call.1} parent=1 // pred_region
      %s30 = sadd.s32 0, 0
      %p31 = scmp.lt.s32.totalorder %s30, 0
      %s32 = scalar_select %p31, %s30, 0
      %s33 = smul.u32 2, %s32
      %s35 = ssub.s32 256, 256
      %36 = vsyncadd [#allocation7], %s35
      %s37 = smul.addr %s33, 128
      %s38 = scalar_lea.hbm %s1, %s37
      %s39 = sshll.u32 [#allocation6], 4
      %s40 = int_to_ptr.vmem [resolvable:$true] %s39
      %45 = dma.hbm_to_vmem [thread:$0]  %s38, 256, %s40, [#allocation7], 128, 128, 8
    $region9: #{tpu_custom_call.1} parent=1 // pred_fallthru
      _
    // Predicated region
    $region10: #{tpu_custom_call.1} parent=1 // pred_check
      _
    $region11: #{tpu_custom_call.1} parent=1 // pred_check_branch
      %47 = sbr.rel (0) target = $region13
    $region12: #{tpu_custom_call.1} parent=1 // pred_region
      %48 = dma.done [#allocation4], 256
    $region13: #{tpu_custom_call.1} parent=1 // pred_fallthru
      _
    // Predicated region
    $region14: #{tpu_custom_call.1} parent=1 // pred_check
      _
    $region15: #{tpu_custom_call.1} parent=1 // pred_check_branch
      %50 = sbr.rel (0) target = $region17
    $region16: #{tpu_custom_call.1} parent=1 // pred_region
      %51 = dma.done [#allocation7], 256
    $region17: #{tpu_custom_call.1} parent=1 // pred_fallthru
      _
    %s52 = sadd.s32 0, 0
    %p53 = scmp.lt.s32.totalorder %s52, 0
    %s54 = scalar_select %p53, %s52, 0
    %s55 = smul.u32 2, %s54
    %s56 = sadd.s32 0, 0
    %p57 = scmp.lt.s32.totalorder %s56, 0
    %s58 = scalar_select %p57, %s56, 0
    %s59 = smul.u32 2, %s58
    %p60 = scmp.eq.s32.totalorder 0, 0
    // Predicated region
    $region18: #{tpu_custom_call.1} parent=1 // pred_check
      %p61 = pneg %p60
    $region19: #{tpu_custom_call.1} parent=1 // pred_check_branch
      %63 = sbr.rel (%p61) target = $region21
    $region20: #{tpu_custom_call.1} parent=1 // pred_region
      %vm64 = vcmask 302080
      %65 = vst.msk [vmem:[#allocation2] sm:$0xff] %vm64, 0.0
      %66 = vst.msk [vmem:[#allocation2 + $0x8] sm:$0xff] %vm64, 0.0
    $region21: #{tpu_custom_call.1} parent=1 // pred_fallthru
      _
    %s67 = sadd.s32 0, 0
    %s68 = smul.u32 %s67, 16
    %v69 = vlaneseq
    %v70 = vshrl.u32 %v69, 7
    %v71 = vadd.s32 %v70, 8
    %v72 = vld [vmem:[#allocation3] sm:$0xff]
    %v73 = vld [vmem:[#allocation3 + $0x8] sm:$0xff]
    %v74 = vld [vmem:[#allocation6] sm:$0xff]
    %v75 = vld [vmem:[#allocation6 + $0x8] sm:$0xff]
    %v76 = vsub.f32 %v72, %v74
    %v77 = vsub.f32 %v73, %v75
    %v78 = vsub.f32 0.0, %v76
    %v79 = vsub.f32 0.0, %v77
    %v80 = vmax.f32 %v78, 0.0
    %v81 = vmax.f32 %v79, 0.0
    %v82 = vand.u32 2147483647, %v76
    %v83 = vand.u32 2147483647, %v77
    %v84 = vsub.f32 0.0, %v82
    %v85 = vsub.f32 0.0, %v83
    %v86 = vmul.f32 %v84, 1.442695
    %v87 = vpow.pop %v86
    %v88 = vmul.f32 %v85, 1.442695
    %v89 = vpow.pop %v88
    %v90 = vadd.f32 %v87, 1.0
    %v91 = vlog2.pop %v90
    %v92 = vmul.f32 %v91, 0.6931472
    %v93 = vmul.f32 -0.5, %v87
    %v94 = vadd.f32 %v93, 1.0
    %v95 = vmul.f32 %v94, %v87
    %v96 = vand.u32 2147483647, %v87
    %vm97 = vcmp.lt.f32.partialorder %v96, 0.0004427343
    %v98 = vsel %vm97, %v95, %v92
    %v99 = vadd.f32 %v89, 1.0
    %v100 = vlog2.pop %v99
    %v101 = vmul.f32 %v100, 0.6931472
    %v102 = vmul.f32 -0.5, %v89
    %v103 = vadd.f32 %v102, 1.0
    %v104 = vmul.f32 %v103, %v89
    %v105 = vand.u32 2147483647, %v89
    %vm106 = vcmp.lt.f32.partialorder %v105, 0.0004427343
    %v107 = vsel %vm106, %v104, %v101
    %v108 = vadd.f32 %v80, %v98
    %v109 = vadd.f32 %v81, %v107
    %s110 = sadd.s32 %s68, 0
    %v111 = vstv %s110
    %v112 = vadd.s32 %v70, %v111
    %v113 = vadd.s32 %v71, %v111
    %vm114 = vcmp.lt.s32.totalorder %v112, 16
    %vm115 = vcmp.lt.s32.totalorder %v113, 16
    %v116 = vld [vmem:[#allocation2] sm:$0xff]
    %v117 = vld [vmem:[#allocation2 + $0x8] sm:$0xff]
    %v118 = vsel %vm114, %v108, 0.0
    %v119 = vsel %vm115, %v109, 0.0
    %v120 = vadd.f32 %v116, %v118
    %v121 = vadd.f32 %v117, %v119
    %vm122 = vcmask 302080
    %123 = vst.msk [vmem:[#allocation2] sm:$0xff] %vm122, %v120
    %124 = vst.msk [vmem:[#allocation2 + $0x8] sm:$0xff] %vm122, %v121
    // Predicated region
    $region22: #{tpu_custom_call.1} parent=1 // pred_check
      %p125 = pneg %p60
    $region23: #{tpu_custom_call.1} parent=1 // pred_check_branch
      %127 = sbr.rel (%p125) target = $region25
    $region24: #{tpu_custom_call.1} parent=1 // pred_region
      %v128 = vld [vmem:[#allocation2] sm:$0xff]
      %v129 = vld [vmem:[#allocation2 + $0x8] sm:$0xff]
      %v130 = vsel %vm122, %v128, 0.0
      %v131 = vsel %vm122, %v129, 0.0
      %v132 = vadd.f32 %v130, %v131
      %v133 = vrot.slane %v132, 4
      %v134 = vadd.f32 %v132, %v133
      %v135 = vrot.slane %v134, 2
      %v136 = vadd.f32 %v134, %v135
      %v137 = vrot.slane %v136, 1
      %v138 = vadd.f32 %v136, %v137
      %vm139 = vcmask 294912
      %140 = vst.msk [vmem:[#allocation8] sm:$0x1] %vm139, %v138
    $region25: #{tpu_custom_call.1} parent=1 // pred_fallthru
      _
    // Predicated region
    $region26: #{tpu_custom_call.1} parent=1 // pred_check
      _
    $region27: #{tpu_custom_call.1} parent=1 // pred_check_branch
      %142 = sbr.rel (0) target = $region29
    $region28: #{tpu_custom_call.1} parent=1 // pred_region
      %s144 = ssub.s32 16, 16
      %145 = vsyncadd [#allocation5], %s144
      %s147 = sshll.u32 [#allocation8], 4
      %s148 = int_to_ptr.vmem [resolvable:$true] %s147
      %150 = dma.vmem_to_hbm [thread:$0]  %s148, 16, %s2, [#allocation5]
    $region29: #{tpu_custom_call.1} parent=1 // pred_fallthru
      _
    // Predicated region
    $region30: #{tpu_custom_call.1} parent=1 // pred_check
      _
    $region31: #{tpu_custom_call.1} parent=1 // pred_check_branch
      %152 = sbr.rel (0) target = $region33
    $region32: #{tpu_custom_call.1} parent=1 // pred_region
      %153 = dma.done [#allocation5], 16
    $region33: #{tpu_custom_call.1} parent=1 // pred_fallthru
      _
    %154 = vsyncpa [#allocation4], 1
    %155 = vsyncpa [#allocation7], 1
    %156 = vsyncpa [#allocation5], 1

</llo_original>
